<compile_context>
chip_gen: v7x
topology: tpu7x:2x2x1
jax: 0.10.0
libtpu: 0.0.40
codegen_flags: <defaults>
</compile_context>

<pallas_src>
import functools

import jax
import jax.numpy as jnp
from jax.experimental import pallas as pl
from jax.experimental.pallas import tpu as pltpu


def autopad(k, p=None):
    if p is None:
        p = k // 2 if isinstance(k, int) else [x // 2 for x in k]
    return p


def _round_up(x, m):
    return (x + m - 1) // m * m


def _matmul_bn_silu_kernel(a_ref, w_ref, scale_ref, bias_ref, o_ref, *, act, approx):
    # a_ref:     (TM, Kc)   bf16 im2col rows (Kc = k*k*C1, full contraction)
    # w_ref:     (Kc, TN)   bf16 weights (Cout tile, zero-padded lane-dense)
    # scale/bias:(1,  TN)   f32 folded BatchNorm affine
    # o_ref:     (TM, TN)
    acc = jnp.dot(a_ref[...], w_ref[...], preferred_element_type=jnp.float32)
    y = acc * scale_ref[...] + bias_ref[...]
    if act:
        if approx:
            # SiLU = y * sigmoid(y); exp + approx reciprocal both hit the EUP slot.
            y = y * pl.reciprocal(1.0 + jnp.exp(-y), approx=True)
        else:
            y = y * (1.0 / (1.0 + jnp.exp(-y)))
    o_ref[...] = y.astype(o_ref.dtype)


def conv_forward(x_nchw, weight, gamma, beta, running_mean, running_var,
                 k=3, s=1, p=None, g=1, eps=1e-5, act=True,
                 approx_sigmoid=True, out_dtype=None):
    """Equivalent of Conv.forward(x) = SiLU(BN(Conv2d(x))) in inference mode."""
    if g != 1:
        # TODO(synk): grouped convolution (g > 1) not implemented.
        raise NotImplementedError("grouped conv not supported")
    p = autopad(k, p)
    N, C1, H, W = x_nchw.shape
    C2 = weight.shape[0]
    out_dtype = x_nchw.dtype if out_dtype is None else out_dtype
    bpe_out = jnp.dtype(out_dtype).itemsize
    act = bool(act)

    Ho = (H + 2 * p - k) // s + 1
    Wo = (W + 2 * p - k) // s + 1
    Kc = k * k * C1                                 # fused contraction depth
    C2p = _round_up(C2, 128)                        # lane-dense Cout
    M = N * Ho * Wo

    # --- wrapper-side glue (XLA): NCHW -> padded NHWC -> im2col rows -----------
    # Stride/tap extraction happens here once, so the kernel never does strided
    # slices or per-tap reshapes.
    x_nhwc = jnp.transpose(x_nchw, (0, 2, 3, 1))
    xp = jnp.pad(x_nhwc, ((0, 0), (p, p), (p, p), (0, 0)))
    cols = []
    for ki in range(k):
        for kj in range(k):
            cols.append(jax.lax.slice(
                xp,
                (0, ki, kj, 0),
                (N, ki + s * (Ho - 1) + 1, kj + s * (Wo - 1) + 1, C1),
                (1, s, s, 1)))                      # (N, Ho, Wo, C1)
    A = jnp.concatenate(cols, axis=-1)              # (N, Ho, Wo, k*k*C1)
    A = A.reshape(M, Kc).astype(jnp.bfloat16)

    # PyTorch weight (C2, C1, k, k) -> (k*k*C1, C2p): tap-major, channel-minor,
    # matching the im2col column order above; Cout zero-padded.
    Wm = jnp.transpose(weight, (2, 3, 1, 0)).reshape(Kc, C2)
    Wm = jnp.pad(Wm, ((0, 0), (0, C2p - C2))).astype(jnp.bfloat16)

    # Fold BatchNorm2d (inference / running statistics) into scale & bias.
    # TODO(synk): training-mode BN (batch statistics + running-stat update).
    inv_std = 1.0 / jnp.sqrt(running_var.astype(jnp.float32) + eps)
    scale = (gamma.astype(jnp.float32) * inv_std)
    bias = (beta.astype(jnp.float32) - running_mean.astype(jnp.float32) * scale)
    scale = jnp.pad(scale, (0, C2p - C2)).reshape(1, C2p)
    bias = jnp.pad(bias, (0, C2p - C2)).reshape(1, C2p)

    # --- tiling: Cout tiles of 128/256, M tiles sized by generation-aware VMEM --
    TN = 256 if (C2p % 256 == 0) else 128
    nCo = C2p // TN

    try:
        vmem_cap = int(pltpu.get_tpu_info().vmem_capacity_bytes)
    except Exception:
        vmem_cap = 64 * 2 ** 20                     # conservative (v7x-class)
    budget = int(0.70 * vmem_cap)                   # headroom for Mosaic scratch

    Kc_lane = _round_up(Kc, 128)                    # VMEM lane padding of LHS
    Kc_sub = _round_up(Kc, 16)                      # bf16 sublane padding of RHS
    w_bufs = 1 if nCo == 1 else 2

    def vmem_est(tm):
        a_b = 2 * tm * Kc_lane * 2                  # double-buffered LHS tile
        w_b = w_bufs * Kc_sub * TN * 2              # weights (single-buf if const)
        sb_b = 2 * 2 * 8 * TN * 4                   # BN scale/bias (sublane-padded)
        o_b = 2 * tm * TN * bpe_out                 # double-buffered output tile
        acc_b = tm * TN * 4                         # live f32 accumulator
        return a_b + w_b + sb_b + o_b + acc_b

    m_cap = max(_round_up(M, 8), 8)
    TM = 8
    for cand in (4096, 2048, 1024, 512, 256, 128, 64, 32, 16, 8):
        if cand <= m_cap and vmem_est(cand) <= budget:
            TM = cand
            break

    Mp = _round_up(M, TM)
    if Mp != M:
        A = jnp.pad(A, ((0, Mp - M), (0, 0)))       # zero rows, sliced off later
    nM = Mp // TM

    vmem_limit = int(min(0.9 * vmem_cap, max(2 * vmem_est(TM), 32 * 2 ** 20)))

    cost = pl.CostEstimate(
        flops=2 * Mp * Kc * C2p,
        transcendentals=(Mp * C2p) if act else 0,
        bytes_accessed=int(nCo * Mp * Kc * 2 + Kc * C2p * 2 + 2 * C2p * 4
                           + Mp * C2p * bpe_out))

    # Grid-invariant operands -> single-buffered (frees VMEM for bigger TM).
    if nCo == 1:
        w_spec = pl.BlockSpec((Kc, TN), lambda co, m: (0, co),
                              pipeline_mode=pl.Buffered(1))
        scale_spec = pl.BlockSpec((1, TN), lambda co, m: (0, co),
                                  pipeline_mode=pl.Buffered(1))
        bias_spec = pl.BlockSpec((1, TN), lambda co, m: (0, co),
                                 pipeline_mode=pl.Buffered(1))
    else:
        w_spec = pl.BlockSpec((Kc, TN), lambda co, m: (0, co))
        scale_spec = pl.BlockSpec((1, TN), lambda co, m: (0, co))
        bias_spec = pl.BlockSpec((1, TN), lambda co, m: (0, co))

    kernel = functools.partial(_matmul_bn_silu_kernel, act=act,
                               approx=bool(approx_sigmoid))

    out = pl.pallas_call(
        kernel,
        out_shape=jax.ShapeDtypeStruct((Mp, C2p), out_dtype),
        grid_spec=pltpu.PrefetchScalarGridSpec(
            num_scalar_prefetch=0,
            grid=(nCo, nM),
            in_specs=[
                pl.BlockSpec((TM, Kc), lambda co, m: (m, 0)),   # im2col rows
                w_spec,                                         # weights
                scale_spec,                                     # BN scale
                bias_spec,                                      # BN bias
            ],
            out_specs=pl.BlockSpec((TM, TN), lambda co, m: (m, co)),
        ),
        compiler_params=pltpu.CompilerParams(
            dimension_semantics=("parallel", "parallel"),  # megacore on v7x
            vmem_limit_bytes=vmem_limit),
        cost_estimate=cost,
    )(A, Wm, scale, bias)

    # Drop M / Cout padding, back to NCHW.
    y = out[:M, :C2].reshape(N, Ho, Wo, C2)
    return jnp.transpose(y, (0, 3, 1, 2)).astype(out_dtype)


def _reference(x_nchw, weight, gamma, beta, running_mean, running_var,
               k=3, s=1, p=None, eps=1e-5):
    p = autopad(k, p)
    y = jax.lax.conv_general_dilated(
        x_nchw, weight, window_strides=(s, s), padding=[(p, p), (p, p)],
        dimension_numbers=("NCHW", "OIHW", "NCHW"))
    sc = (gamma / jnp.sqrt(running_var + eps)).reshape(1, -1, 1, 1)
    bs = (beta - running_mean * gamma / jnp.sqrt(running_var + eps)).reshape(1, -1, 1, 1)
    y = y * sc + bs
    return y * jax.nn.sigmoid(y)


if __name__ == "__main__":
    # Conv(c1=4, c2=8, k=3, s=1)  ->  conv weight (8, 4, 3, 3), BN params (8,)
    key = jax.random.PRNGKey(0)
    kx, kw, kg, kb, km, kv = jax.random.split(key, 6)

    N, C1, H, W = 2, 4, 16, 16
    C2, K = 8, 3

    x = jax.random.normal(kx, (N, C1, H, W), dtype=jnp.float32)
    weight = jax.random.normal(kw, (C2, C1, K, K), dtype=jnp.float32) * 0.1
    gamma = 1.0 + 0.1 * jax.random.normal(kg, (C2,), dtype=jnp.float32)
    beta = 0.1 * jax.random.normal(kb, (C2,), dtype=jnp.float32)
    running_mean = 0.1 * jax.random.normal(km, (C2,), dtype=jnp.float32)
    running_var = 1.0 + 0.1 * jax.random.uniform(kv, (C2,), dtype=jnp.float32)

    out = conv_forward(x, weight, gamma, beta, running_mean, running_var, k=K, s=1)
    out = jax.block_until_ready(out)

    ref = _reference(x, weight, gamma, beta, running_mean, running_var, k=K, s=1)
    assert out.shape == (N, C2, H, W), out.shape
    err = float(jnp.max(jnp.abs(out - ref)))
    assert jnp.allclose(out, ref, atol=2e-2, rtol=2e-2), err

    print("KERNEL_OK")
</pallas_src>

<mosaic_0001>
module attributes {stable_mosaic.version = 11 : i64} {
  func.func @_matmul_bn_silu_kernel(%arg0: i32, %arg1: i32, %arg2: memref<512x36xbf16, #tpu.memory_space<vmem>>, %arg3: memref<36x128xbf16, #tpu.memory_space<vmem>>, %arg4: memref<1x128xf32, #tpu.memory_space<vmem>>, %arg5: memref<1x128xf32, #tpu.memory_space<vmem>>, %arg6: memref<512x128xf32, #tpu.memory_space<vmem>>) attributes {dimension_semantics = [#tpu.dimension_semantics<parallel>, #tpu.dimension_semantics<parallel>], iteration_bounds = array<i64: 1, 1>, scalar_prefetch = 0 : i64, scratch_operands = 0 : i64, tpu.core_type = #tpu.core_type<tc>, window_params = [{transform_indices = @transform_0, window_bounds = array<i64: 512, 36>}, {pipeline_mode = #tpu.pipeline_mode<synchronous>, transform_indices = @transform_1, window_bounds = array<i64: 36, 128>}, {pipeline_mode = #tpu.pipeline_mode<synchronous>, transform_indices = @transform_2, window_bounds = array<i64: 1, 128>}, {pipeline_mode = #tpu.pipeline_mode<synchronous>, transform_indices = @transform_3, window_bounds = array<i64: 1, 128>}, {transform_indices = @transform_4, window_bounds = array<i64: 512, 128>}]} {
    %c0 = arith.constant 0 : index
    %c0_0 = arith.constant 0 : index
    %0 = vector.load %arg2[%c0, %c0_0] : memref<512x36xbf16, #tpu.memory_space<vmem>>, vector<512x36xbf16>
    %c0_1 = arith.constant 0 : index
    %c0_2 = arith.constant 0 : index
    %1 = vector.load %arg3[%c0_1, %c0_2] : memref<36x128xbf16, #tpu.memory_space<vmem>>, vector<36x128xbf16>
    %cst = arith.constant dense<0.000000e+00> : vector<512x128xf32>
    %2 = tpu.matmul %0, %1, %cst {dimension_numbers = #tpu.dot_dimension_numbers<[1], [0], [0], [1], [0, 0, 1, 1], [], []>} : vector<512x36xbf16>, vector<36x128xbf16>, vector<512x128xf32> -> vector<512x128xf32>
    %c0_3 = arith.constant 0 : index
    %c0_4 = arith.constant 0 : index
    %3 = vector.load %arg4[%c0_3, %c0_4] : memref<1x128xf32, #tpu.memory_space<vmem>>, vector<1x128xf32>
    %4 = vector.broadcast %3 : vector<1x128xf32> to vector<512x128xf32>
    %5 = arith.mulf %2, %4 : vector<512x128xf32>
    %c0_5 = arith.constant 0 : index
    %c0_6 = arith.constant 0 : index
    %6 = vector.load %arg5[%c0_5, %c0_6] : memref<1x128xf32, #tpu.memory_space<vmem>>, vector<1x128xf32>
    %7 = vector.broadcast %6 : vector<1x128xf32> to vector<512x128xf32>
    %8 = arith.addf %5, %7 : vector<512x128xf32>
    %cst_7 = arith.constant 0.000000e+00 : f32
    %9 = vector.broadcast %cst_7 : f32 to vector<512x128xf32>
    %10 = arith.subf %9, %8 : vector<512x128xf32>
    %11 = math.exp %10 : vector<512x128xf32>
    %cst_8 = arith.constant 1.000000e+00 : f32
    %12 = vector.broadcast %cst_8 : f32 to vector<512x128xf32>
    %13 = arith.addf %12, %11 : vector<512x128xf32>
    %14 = tpu.reciprocal %13 {approx = true} : vector<512x128xf32> -> vector<512x128xf32>
    %15 = arith.mulf %8, %14 : vector<512x128xf32>
    %c0_9 = arith.constant 0 : index
    %c0_10 = arith.constant 0 : index
    %16 = vector.load %arg6[%c0_9, %c0_10] : memref<512x128xf32, #tpu.memory_space<vmem>>, vector<512x128xf32>
    tpu.vector_store %arg6[%c0_9, %c0_10], %15 {strides = array<i32>} : memref<512x128xf32, #tpu.memory_space<vmem>>, vector<512x128xf32>,
    return
  }
  func.func @transform_0(%arg0: i32, %arg1: i32) -> (i32, i32) {
    %c0_i32 = arith.constant 0 : i32
    %c0_i32_0 = arith.constant 0 : i32
    return %arg1, %c0_i32 : i32, i32
  }
  func.func @transform_1(%arg0: i32, %arg1: i32) -> (i32, i32) {
    %c0_i32 = arith.constant 0 : i32
    %c0_i32_0 = arith.constant 0 : i32
    return %c0_i32, %arg0 : i32, i32
  }
  func.func @transform_2(%arg0: i32, %arg1: i32) -> (i32, i32) {
    %c0_i32 = arith.constant 0 : i32
    %c0_i32_0 = arith.constant 0 : i32
    return %c0_i32, %arg0 : i32, i32
  }
  func.func @transform_3(%arg0: i32, %arg1: i32) -> (i32, i32) {
    %c0_i32 = arith.constant 0 : i32
    %c0_i32_0 = arith.constant 0 : i32
    return %c0_i32, %arg0 : i32, i32
  }
  func.func @transform_4(%arg0: i32, %arg1: i32) -> (i32, i32) {
    %c0_i32 = arith.constant 0 : i32
    return %arg1, %arg0 : i32, i32
  }
}

</mosaic_0001>

<llo_original>
// kernel: tpu_custom_call.1
$region0: #{tpu_custom_call.1}
  #allocation0 [shape = 'u32[]', space=smem, size = 0x4, offset = 0x4, fixed_abs, tag = 'smem constant byte address 0x4 - core index']
  #allocation1 [shape = 'u32[144,128]{1,0:T(1,128)}', space=vmem, size = 0x12000, scoped, tag = 'internal scratch']
  %s0 = inlined_call_operand.vmem [shape: bf16[512,36], index: 0, kind: input, shape index: {}]
  %s1 = inlined_call_operand.vmem [shape: bf16[36,128], index: 1, kind: input, shape index: {}]
  %s2 = inlined_call_operand.vmem [shape: f32[1,128], index: 2, kind: input, shape index: {}]
  %s3 = inlined_call_operand.vmem [shape: f32[1,128], index: 3, kind: input, shape index: {}]
  %s4 = inlined_call_operand.hbm [shape: f32[512,128], index: 4, kind: output, shape index: {}]
  %s5 = sld [smem:[#allocation0]]
  $region26: #{tpu_custom_call.1} parent=0
    _
  %s7 = ssub.s32 1, %s5
  %s8 = scalar_select 0, %s7, %s5
  $region1: #{tpu_custom_call.1} parent=0
    #allocation2 [shape = 'u8[262144]{0}', space=vmem, size = 0x40000, scoped, tag = 'output window, operand 0, single buffered']
    #allocation3 [shape = 's32[1]{0}', space=sflag, size = 0x4, scoped, tag = 'scoped memory for tpu_custom_call.1']
    %9 = vsyncpa [#allocation3], 0
    // Predicated region
    $region2: #{tpu_custom_call.1} parent=1 // pred_check
      _
    $region3: #{tpu_custom_call.1} parent=1 // pred_check_branch
      %11 = sbr.rel (0) target = $region5
    $region4: #{tpu_custom_call.1} parent=1 // pred_region
      _
    $region5: #{tpu_custom_call.1} parent=1 // pred_fallthru
      _
    // Predicated region
    $region6: #{tpu_custom_call.1} parent=1 // pred_check
      _
    $region7: #{tpu_custom_call.1} parent=1 // pred_check_branch
      %13 = sbr.rel (0) target = $region9
    $region8: #{tpu_custom_call.1} parent=1 // pred_region
      _
    $region9: #{tpu_custom_call.1} parent=1 // pred_fallthru
      _
    // Predicated region
    $region10: #{tpu_custom_call.1} parent=1 // pred_check
      _
    $region11: #{tpu_custom_call.1} parent=1 // pred_check_branch
      %15 = sbr.rel (0) target = $region13
    $region12: #{tpu_custom_call.1} parent=1 // pred_region
      _
    $region13: #{tpu_custom_call.1} parent=1 // pred_fallthru
      _
    // Predicated region
    $region14: #{tpu_custom_call.1} parent=1 // pred_check
      _
    $region15: #{tpu_custom_call.1} parent=1 // pred_check_branch
      %17 = sbr.rel (0) target = $region17
    $region16: #{tpu_custom_call.1} parent=1 // pred_region
      _
    $region17: #{tpu_custom_call.1} parent=1 // pred_fallthru
      _
    %v19 = vld [vmem:[%s0] sm:$0xf]
    %v20 = vld [vmem:[%s0 + $0x4] sm:$0xf]
    %v21 = vld [vmem:[%s0 + $0x8] sm:$0xf]
    %v22 = vld [vmem:[%s0 + $0xc] sm:$0xf]
    %v23 = vld [vmem:[%s0 + $0x10] sm:$0xf]
    %v24 = vld [vmem:[%s0 + $0x14] sm:$0xf]
    %v25 = vld [vmem:[%s0 + $0x18] sm:$0xf]
    %v26 = vld [vmem:[%s0 + $0x1c] sm:$0xf]
    %v27 = vld [vmem:[%s0 + $0x20] sm:$0xf]
    %v28 = vld [vmem:[%s0 + $0x24] sm:$0xf]
    %v29 = vld [vmem:[%s0 + $0x28] sm:$0xf]
    %v30 = vld [vmem:[%s0 + $0x2c] sm:$0xf]
    %v31 = vld [vmem:[%s0 + $0x30] sm:$0xf]
    %v32 = vld [vmem:[%s0 + $0x34] sm:$0xf]
    %v33 = vld [vmem:[%s0 + $0x38] sm:$0xf]
    %v34 = vld [vmem:[%s0 + $0x3c] sm:$0xf]
    %v35 = vld [vmem:[%s0 + $0x40] sm:$0xf]
    %v36 = vld [vmem:[%s0 + $0x44] sm:$0xf]
    %v37 = vld [vmem:[%s0 + $0x48] sm:$0xf]
    %v38 = vld [vmem:[%s0 + $0x4c] sm:$0xf]
    %v39 = vld [vmem:[%s0 + $0x50] sm:$0xf]
    %v40 = vld [vmem:[%s0 + $0x54] sm:$0xf]
    %v41 = vld [vmem:[%s0 + $0x58] sm:$0xf]
    %v42 = vld [vmem:[%s0 + $0x5c] sm:$0xf]
    %v43 = vld [vmem:[%s0 + $0x60] sm:$0xf]
    %v44 = vld [vmem:[%s0 + $0x64] sm:$0xf]
    %v45 = vld [vmem:[%s0 + $0x68] sm:$0xf]
    %v46 = vld [vmem:[%s0 + $0x6c] sm:$0xf]
    %v47 = vld [vmem:[%s0 + $0x70] sm:$0xf]
    %v48 = vld [vmem:[%s0 + $0x74] sm:$0xf]
    %v49 = vld [vmem:[%s0 + $0x78] sm:$0xf]
    %v50 = vld [vmem:[%s0 + $0x7c] sm:$0xf]
    %v51 = vld [vmem:[%s0 + $0x80] sm:$0xf]
    %v52 = vld [vmem:[%s0 + $0x84] sm:$0xf]
    %v53 = vld [vmem:[%s0 + $0x88] sm:$0xf]
    %v54 = vld [vmem:[%s0 + $0x8c] sm:$0xf]
    %v55 = vld [vmem:[%s0 + $0x90] sm:$0xf]
    %v56 = vld [vmem:[%s0 + $0x94] sm:$0xf]
    %v57 = vld [vmem:[%s0 + $0x98] sm:$0xf]
    %v58 = vld [vmem:[%s0 + $0x9c] sm:$0xf]
    %v59 = vld [vmem:[%s0 + $0xa0] sm:$0xf]
    %v60 = vld [vmem:[%s0 + $0xa4] sm:$0xf]
    %v61 = vld [vmem:[%s0 + $0xa8] sm:$0xf]
    %v62 = vld [vmem:[%s0 + $0xac] sm:$0xf]
    %v63 = vld [vmem:[%s0 + $0xb0] sm:$0xf]
    %v64 = vld [vmem:[%s0 + $0xb4] sm:$0xf]
    %v65 = vld [vmem:[%s0 + $0xb8] sm:$0xf]
    %v66 = vld [vmem:[%s0 + $0xbc] sm:$0xf]
    %v67 = vld [vmem:[%s0 + $0xc0] sm:$0xf]
    %v68 = vld [vmem:[%s0 + $0xc4] sm:$0xf]
    %v69 = vld [vmem:[%s0 + $0xc8] sm:$0xf]
    %v70 = vld [vmem:[%s0 + $0xcc] sm:$0xf]
    %v71 = vld [vmem:[%s0 + $0xd0] sm:$0xf]
    %v72 = vld [vmem:[%s0 + $0xd4] sm:$0xf]
    %v73 = vld [vmem:[%s0 + $0xd8] sm:$0xf]
    %v74 = vld [vmem:[%s0 + $0xdc] sm:$0xf]
    %v75 = vld [vmem:[%s0 + $0xe0] sm:$0xf]
    %v76 = vld [vmem:[%s0 + $0xe4] sm:$0xf]
    %v77 = vld [vmem:[%s0 + $0xe8] sm:$0xf]
    %v78 = vld [vmem:[%s0 + $0xec] sm:$0xf]
    %v79 = vld [vmem:[%s0 + $0xf0] sm:$0xf]
    %v80 = vld [vmem:[%s0 + $0xf4] sm:$0xf]
    %v81 = vld [vmem:[%s0 + $0xf8] sm:$0xf]
    %v82 = vld [vmem:[%s0 + $0xfc] sm:$0xf]
    %v83 = vld [vmem:[%s1] sm:$0xf]
    %v84 = vld [vmem:[%s1 + $0x4] sm:$0xf]
    %v85 = vld [vmem:[%s1 + $0x8] sm:$0xf]
    %v86 = vld [vmem:[%s1 + $0xc] sm:$0xf]
    %v87 = vld [vmem:[%s1 + $0x10] sm:$0x3]
    %v152 = vunpack.c.l.b16 %v19
    %v153 = vunpack.c.l.b16 %v20
    %v154 = vunpack.c.l.b16 %v21
    %v155 = vunpack.c.l.b16 %v22
    %v156 = vunpack.c.l.b16 %v23
    %v157 = vunpack.c.l.b16 %v24
    %v158 = vunpack.c.l.b16 %v25
    %v159 = vunpack.c.l.b16 %v26
    %v160 = vunpack.c.l.b16 %v27
    %v161 = vunpack.c.l.b16 %v28
    %v162 = vunpack.c.l.b16 %v29
    %v163 = vunpack.c.l.b16 %v30
    %v164 = vunpack.c.l.b16 %v31
    %v165 = vunpack.c.l.b16 %v32
    %v166 = vunpack.c.l.b16 %v33
    %v167 = vunpack.c.l.b16 %v34
    %v168 = vunpack.c.l.b16 %v35
    %v169 = vunpack.c.l.b16 %v36
    %v170 = vunpack.c.l.b16 %v37
    %v171 = vunpack.c.l.b16 %v38
    %v172 = vunpack.c.l.b16 %v39
    %v173 = vunpack.c.l.b16 %v40
    %v174 = vunpack.c.l.b16 %v41
    %v175 = vunpack.c.l.b16 %v42
    %v176 = vunpack.c.l.b16 %v43
    %v177 = vunpack.c.l.b16 %v44
    %v178 = vunpack.c.l.b16 %v45
    %v179 = vunpack.c.l.b16 %v46
    %v180 = vunpack.c.l.b16 %v47
    %v181 = vunpack.c.l.b16 %v48
    %v182 = vunpack.c.l.b16 %v49
    %v183 = vunpack.c.l.b16 %v50
    %v184 = vunpack.c.l.b16 %v51
    %v185 = vunpack.c.l.b16 %v52
    %v186 = vunpack.c.l.b16 %v53
    %v187 = vunpack.c.l.b16 %v54
    %v188 = vunpack.c.l.b16 %v55
    %v189 = vunpack.c.l.b16 %v56
    %v190 = vunpack.c.l.b16 %v57
    %v191 = vunpack.c.l.b16 %v58
    %v192 = vunpack.c.l.b16 %v59
    %v193 = vunpack.c.l.b16 %v60
    %v194 = vunpack.c.l.b16 %v61
    %v195 = vunpack.c.l.b16 %v62
    %v196 = vunpack.c.l.b16 %v63
    %v197 = vunpack.c.l.b16 %v64
    %v198 = vunpack.c.l.b16 %v65
    %v199 = vunpack.c.l.b16 %v66
    %v200 = vunpack.c.l.b16 %v67
    %v201 = vunpack.c.l.b16 %v68
    %v202 = vunpack.c.l.b16 %v69
    %v203 = vunpack.c.l.b16 %v70
    %v204 = vunpack.c.l.b16 %v71
    %v205 = vunpack.c.l.b16 %v72
    %v206 = vunpack.c.l.b16 %v73
    %v207 = vunpack.c.l.b16 %v74
    %v208 = vunpack.c.l.b16 %v75
    %v209 = vunpack.c.l.b16 %v76
    %v210 = vunpack.c.l.b16 %v77
    %v211 = vunpack.c.l.b16 %v78
    %v212 = vunpack.c.l.b16 %v79
    %v213 = vunpack.c.l.b16 %v80
    %v214 = vunpack.c.l.b16 %v81
    %v215 = vunpack.c.l.b16 %v82
    %v216 = vpack.c.b16 %v153, %v152
    %v217 = vpack.c.b16 %v155, %v154
    %v218 = vpack.c.b16 %v157, %v156
    %v219 = vpack.c.b16 %v159, %v158
    %v220 = vpack.c.b16 %v161, %v160
    %v221 = vpack.c.b16 %v163, %v162
    %v222 = vpack.c.b16 %v165, %v164
    %v223 = vpack.c.b16 %v167, %v166
    %v224 = vpack.c.b16 %v169, %v168
    %v225 = vpack.c.b16 %v171, %v170
    %v226 = vpack.c.b16 %v173, %v172
    %v227 = vpack.c.b16 %v175, %v174
    %v228 = vpack.c.b16 %v177, %v176
    %v229 = vpack.c.b16 %v179, %v178
    %v230 = vpack.c.b16 %v181, %v180
    %v231 = vpack.c.b16 %v183, %v182
    %v232 = vpack.c.b16 %v185, %v184
    %v233 = vpack.c.b16 %v187, %v186
    %v234 = vpack.c.b16 %v189, %v188
    %v235 = vpack.c.b16 %v191, %v190
    %v236 = vpack.c.b16 %v193, %v192
    %v237 = vpack.c.b16 %v195, %v194
    %v238 = vpack.c.b16 %v197, %v196
    %v239 = vpack.c.b16 %v199, %v198
    %v240 = vpack.c.b16 %v201, %v200
    %v241 = vpack.c.b16 %v203, %v202
    %v242 = vpack.c.b16 %v205, %v204
    %v243 = vpack.c.b16 %v207, %v206
    %v244 = vpack.c.b16 %v209, %v208
    %v245 = vpack.c.b16 %v211, %v210
    %v246 = vpack.c.b16 %v213, %v212
    %v247 = vpack.c.b16 %v215, %v214
    %v253 = vunpack.c.l.b16 %v83
    %v254 = vunpack.c.l.b16 %v84
    %v255 = vunpack.c.l.b16 %v85
    %v256 = vunpack.c.l.b16 %v86
    %v257 = vunpack.c.l.b16 %v87
    %v258 = vpack.c.b16 %v254, %v253
    %v259 = vpack.c.b16 %v256, %v255
    %v260 = vpack.c.b16 %v257, %v257
    %vm263 = vcmask 293888
    %v265 = vsel %vm263, %v216, 0
    %v268 = vsel %vm263, %v217, 0
    %v271 = vsel %vm263, %v218, 0
    %v274 = vsel %vm263, %v219, 0
    %v277 = vsel %vm263, %v220, 0
    %v280 = vsel %vm263, %v221, 0
    %v283 = vsel %vm263, %v222, 0
    %v286 = vsel %vm263, %v223, 0
    %v289 = vsel %vm263, %v224, 0
    %v292 = vsel %vm263, %v225, 0
    %v295 = vsel %vm263, %v226, 0
    %v298 = vsel %vm263, %v227, 0
    %v301 = vsel %vm263, %v228, 0
    %v304 = vsel %vm263, %v229, 0
    %v307 = vsel %vm263, %v230, 0
    %v310 = vsel %vm263, %v231, 0
    %v313 = vsel %vm263, %v232, 0
    %v316 = vsel %vm263, %v233, 0
    %v319 = vsel %vm263, %v234, 0
    %v322 = vsel %vm263, %v235, 0
    %v325 = vsel %vm263, %v236, 0
    %v328 = vsel %vm263, %v237, 0
    %v331 = vsel %vm263, %v238, 0
    %v334 = vsel %vm263, %v239, 0
    %v337 = vsel %vm263, %v240, 0
    %v340 = vsel %vm263, %v241, 0
    %v343 = vsel %vm263, %v242, 0
    %v346 = vsel %vm263, %v243, 0
    %v349 = vsel %vm263, %v244, 0
    %v352 = vsel %vm263, %v245, 0
    %v355 = vsel %vm263, %v246, 0
    %v358 = vsel %vm263, %v247, 0
    %vm360 = vcmask 1041408
    %v362 = vsel %vm360, %v260, 0
    %364 = vmatprep.subr.bf16.mxu0 0
    %365 = vmatpush1.bf16.msra.mxu0 %v258
    %366 = vmatprep.subr.bf16.mxu0 0
    %367 = vmatpush1.bf16.msra.mxu0 %v259
    %368 = vmatprep.subr.bf16.mxu0 0
    %369 = vmatpush1.bf16.msra.mxu0 %v362
    %370 = vmatprep.subr.bf16.mxu0 0
    %371 = vmatpush1.bf16.msra.mxu0 0
    %372 = vmatprep.subr.bf16.mxu0 0
    %373 = vmatpush1.bf16.msra.mxu0 0
    %374 = vmatprep.subr.bf16.mxu0 0
    %375 = vmatpush1.bf16.msra.mxu0 0
    %376 = vmatprep.subr.bf16.mxu0 0
    %377 = vmatpush1.bf16.msra.mxu0 0
    %378 = vmatprep.subr.bf16.mxu0 0
    %379 = vmatpush1.bf16.msra.mxu0 0
    %380 = vmatprep.subr.bf16.mxu0 0
    %381 = vmatpush1.bf16.msra.mxu0 0
    %382 = vmatprep.subr.bf16.mxu0 0
    %383 = vmatpush1.bf16.msra.mxu0 0
    %384 = vmatprep.subr.bf16.mxu0 0
    %385 = vmatpush1.bf16.msra.mxu0 0
    %386 = vmatprep.subr.bf16.mxu0 0
    %387 = vmatpush1.bf16.msra.mxu0 0
    %388 = vmatprep.subr.bf16.mxu0 0
    %389 = vmatpush1.bf16.msra.mxu0 0
    %390 = vmatprep.subr.bf16.mxu0 0
    %391 = vmatpush1.bf16.msra.mxu0 0
    %392 = vmatprep.subr.bf16.mxu0 0
    %393 = vmatpush1.bf16.msra.mxu0 0
    %394 = vmatprep.subr.bf16.mxu0 0
    %395 = vmatpush1.bf16.msra.mxu0 0
    %396 = vmatprep.mubr.bf16.mxu0 0
    %397 = vmatmul.mubr.bf16.gmra.mrb[0].mxu0 %v265
    %v398 = vpop.f32.mrb[0].mxu0
    %v399 = vadd.f32 0.0, %v398
    %v400 = vpop.f32.mrb[0].mxu0
    %v401 = vpop.f32.mrb[0].mxu0
    %v402 = vadd.f32 0.0, %v401
    %v403 = vpop.f32.mrb[0].mxu0
    %404 = vmatprep.mubr.bf16.mxu0 0
    %405 = vmatmul.mubr.bf16.gmra.mrb[0].mxu0 %v268
    %v406 = vpop.f32.mrb[0].mxu0
    %v407 = vadd.f32 0.0, %v406
    %v408 = vpop.f32.mrb[0].mxu0
    %v409 = vpop.f32.mrb[0].mxu0
    %v410 = vadd.f32 0.0, %v409
    %v411 = vpop.f32.mrb[0].mxu0
    %412 = vmatprep.mubr.bf16.mxu0 0
    %413 = vmatmul.mubr.bf16.gmra.mrb[0].mxu0 %v271
    %v414 = vpop.f32.mrb[0].mxu0
    %v415 = vadd.f32 0.0, %v414
    %v416 = vpop.f32.mrb[0].mxu0
    %v417 = vpop.f32.mrb[0].mxu0
    %v418 = vadd.f32 0.0, %v417
    %v419 = vpop.f32.mrb[0].mxu0
    %420 = vmatprep.mubr.bf16.mxu0 0
    %421 = vmatmul.mubr.bf16.gmra.mrb[0].mxu0 %v274
    %v422 = vpop.f32.mrb[0].mxu0
    %v423 = vadd.f32 0.0, %v422
    %v424 = vpop.f32.mrb[0].mxu0
    %v425 = vpop.f32.mrb[0].mxu0
    %v426 = vadd.f32 0.0, %v425
    %v427 = vpop.f32.mrb[0].mxu0
    %428 = vmatprep.mubr.bf16.mxu0 0
    %429 = vmatmul.mubr.bf16.gmra.mrb[0].mxu0 %v277
    %v430 = vpop.f32.mrb[0].mxu0
    %v431 = vadd.f32 0.0, %v430
    %v432 = vpop.f32.mrb[0].mxu0
    %v433 = vpop.f32.mrb[0].mxu0
    %v434 = vadd.f32 0.0, %v433
    %v435 = vpop.f32.mrb[0].mxu0
    %436 = vmatprep.mubr.bf16.mxu0 0
    %437 = vmatmul.mubr.bf16.gmra.mrb[0].mxu0 %v280
    %v438 = vpop.f32.mrb[0].mxu0
    %v439 = vadd.f32 0.0, %v438
    %v440 = vpop.f32.mrb[0].mxu0
    %v441 = vpop.f32.mrb[0].mxu0
    %v442 = vadd.f32 0.0, %v441
    %v443 = vpop.f32.mrb[0].mxu0
    %444 = vmatprep.mubr.bf16.mxu0 0
    %445 = vmatmul.mubr.bf16.gmra.mrb[0].mxu0 %v283
    %v446 = vpop.f32.mrb[0].mxu0
    %v447 = vadd.f32 0.0, %v446
    %v448 = vpop.f32.mrb[0].mxu0
    %v449 = vpop.f32.mrb[0].mxu0
    %v450 = vadd.f32 0.0, %v449
    %v451 = vpop.f32.mrb[0].mxu0
    %452 = vmatprep.mubr.bf16.mxu0 0
    %453 = vmatmul.mubr.bf16.gmra.mrb[0].mxu0 %v286
    %v454 = vpop.f32.mrb[0].mxu0
    %v455 = vadd.f32 0.0, %v454
    %v456 = vpop.f32.mrb[0].mxu0
    %v457 = vpop.f32.mrb[0].mxu0
    %v458 = vadd.f32 0.0, %v457
    %v459 = vpop.f32.mrb[0].mxu0
    %460 = vmatprep.mubr.bf16.mxu0 0
    %461 = vmatmul.mubr.bf16.gmra.mrb[0].mxu0 %v289
    %v462 = vpop.f32.mrb[0].mxu0
    %v463 = vadd.f32 0.0, %v462
    %v464 = vpop.f32.mrb[0].mxu0
    %v465 = vpop.f32.mrb[0].mxu0
    %v466 = vadd.f32 0.0, %v465
    %v467 = vpop.f32.mrb[0].mxu0
    %468 = vmatprep.mubr.bf16.mxu0 0
    %469 = vmatmul.mubr.bf16.gmra.mrb[0].mxu0 %v292
    %v470 = vpop.f32.mrb[0].mxu0
    %v471 = vadd.f32 0.0, %v470
    %v472 = vpop.f32.mrb[0].mxu0
    %v473 = vpop.f32.mrb[0].mxu0
    %v474 = vadd.f32 0.0, %v473
    %v475 = vpop.f32.mrb[0].mxu0
    %476 = vmatprep.mubr.bf16.mxu0 0
    %477 = vmatmul.mubr.bf16.gmra.mrb[0].mxu0 %v295
    %v478 = vpop.f32.mrb[0].mxu0
    %v479 = vadd.f32 0.0, %v478
    %v480 = vpop.f32.mrb[0].mxu0
    %v481 = vpop.f32.mrb[0].mxu0
    %v482 = vadd.f32 0.0, %v481
    %v483 = vpop.f32.mrb[0].mxu0
    %484 = vmatprep.mubr.bf16.mxu0 0
    %485 = vmatmul.mubr.bf16.gmra.mrb[0].mxu0 %v298
    %v486 = vpop.f32.mrb[0].mxu0
    %v487 = vadd.f32 0.0, %v486
    %v488 = vpop.f32.mrb[0].mxu0
    %v489 = vpop.f32.mrb[0].mxu0
    %v490 = vadd.f32 0.0, %v489
    %v491 = vpop.f32.mrb[0].mxu0
    %492 = vmatprep.mubr.bf16.mxu0 0
    %493 = vmatmul.mubr.bf16.gmra.mrb[0].mxu0 %v301
    %v494 = vpop.f32.mrb[0].mxu0
    %v495 = vadd.f32 0.0, %v494
    %v496 = vpop.f32.mrb[0].mxu0
    %v497 = vpop.f32.mrb[0].mxu0
    %v498 = vadd.f32 0.0, %v497
    %v499 = vpop.f32.mrb[0].mxu0
    %500 = vmatprep.mubr.bf16.mxu0 0
    %501 = vmatmul.mubr.bf16.gmra.mrb[0].mxu0 %v304
    %v502 = vpop.f32.mrb[0].mxu0
    %v503 = vadd.f32 0.0, %v502
    %v504 = vpop.f32.mrb[0].mxu0
    %v505 = vpop.f32.mrb[0].mxu0
    %v506 = vadd.f32 0.0, %v505
    %v507 = vpop.f32.mrb[0].mxu0
    %508 = vmatprep.mubr.bf16.mxu0 0
    %509 = vmatmul.mubr.bf16.gmra.mrb[0].mxu0 %v307
    %v510 = vpop.f32.mrb[0].mxu0
    %v511 = vadd.f32 0.0, %v510
    %v512 = vpop.f32.mrb[0].mxu0
    %v513 = vpop.f32.mrb[0].mxu0
    %v514 = vadd.f32 0.0, %v513
    %v515 = vpop.f32.mrb[0].mxu0
    %516 = vmatprep.mubr.bf16.mxu0 0
    %517 = vmatmul.mubr.bf16.gmra.mrb[0].mxu0 %v310
    %v518 = vpop.f32.mrb[0].mxu0
    %v519 = vadd.f32 0.0, %v518
    %v520 = vpop.f32.mrb[0].mxu0
    %v521 = vpop.f32.mrb[0].mxu0
    %v522 = vadd.f32 0.0, %v521
    %v523 = vpop.f32.mrb[0].mxu0
    %524 = vmatprep.mubr.bf16.mxu0 0
    %525 = vmatmul.mubr.bf16.gmra.mrb[0].mxu0 %v313
    %v526 = vpop.f32.mrb[0].mxu0
    %v527 = vadd.f32 0.0, %v526
    %v528 = vpop.f32.mrb[0].mxu0
    %v529 = vpop.f32.mrb[0].mxu0
    %v530 = vadd.f32 0.0, %v529
    %v531 = vpop.f32.mrb[0].mxu0
    %532 = vmatprep.mubr.bf16.mxu0 0
    %533 = vmatmul.mubr.bf16.gmra.mrb[0].mxu0 %v316
    %v534 = vpop.f32.mrb[0].mxu0
    %v535 = vadd.f32 0.0, %v534
    %v536 = vpop.f32.mrb[0].mxu0
    %v537 = vpop.f32.mrb[0].mxu0
    %v538 = vadd.f32 0.0, %v537
    %v539 = vpop.f32.mrb[0].mxu0
    %540 = vmatprep.mubr.bf16.mxu0 0
    %541 = vmatmul.mubr.bf16.gmra.mrb[0].mxu0 %v319
    %v542 = vpop.f32.mrb[0].mxu0
    %v543 = vadd.f32 0.0, %v542
    %v544 = vpop.f32.mrb[0].mxu0
    %v545 = vpop.f32.mrb[0].mxu0
    %v546 = vadd.f32 0.0, %v545
    %v547 = vpop.f32.mrb[0].mxu0
    %548 = vmatprep.mubr.bf16.mxu0 0
    %549 = vmatmul.mubr.bf16.gmra.mrb[0].mxu0 %v322
    %v550 = vpop.f32.mrb[0].mxu0
    %v551 = vadd.f32 0.0, %v550
    %v552 = vpop.f32.mrb[0].mxu0
    %v553 = vpop.f32.mrb[0].mxu0
    %v554 = vadd.f32 0.0, %v553
    %v555 = vpop.f32.mrb[0].mxu0
    %556 = vmatprep.mubr.bf16.mxu0 0
    %557 = vmatmul.mubr.bf16.gmra.mrb[0].mxu0 %v325
    %v558 = vpop.f32.mrb[0].mxu0
    %v559 = vadd.f32 0.0, %v558
    %v560 = vpop.f32.mrb[0].mxu0
    %v561 = vpop.f32.mrb[0].mxu0
    %v562 = vadd.f32 0.0, %v561
    %v563 = vpop.f32.mrb[0].mxu0
    %564 = vmatprep.mubr.bf16.mxu0 0
    %565 = vmatmul.mubr.bf16.gmra.mrb[0].mxu0 %v328
    %v566 = vpop.f32.mrb[0].mxu0
    %v567 = vadd.f32 0.0, %v566
    %v568 = vpop.f32.mrb[0].mxu0
    %v569 = vpop.f32.mrb[0].mxu0
    %v570 = vadd.f32 0.0, %v569
    %v571 = vpop.f32.mrb[0].mxu0
    %572 = vmatprep.mubr.bf16.mxu0 0
    %573 = vmatmul.mubr.bf16.gmra.mrb[0].mxu0 %v331
    %v574 = vpop.f32.mrb[0].mxu0
    %v575 = vadd.f32 0.0, %v574
    %v576 = vpop.f32.mrb[0].mxu0
    %v577 = vpop.f32.mrb[0].mxu0
    %v578 = vadd.f32 0.0, %v577
    %v579 = vpop.f32.mrb[0].mxu0
    %580 = vmatprep.mubr.bf16.mxu0 0
    %581 = vmatmul.mubr.bf16.gmra.mrb[0].mxu0 %v334
    %v582 = vpop.f32.mrb[0].mxu0
    %v583 = vadd.f32 0.0, %v582
    %v584 = vpop.f32.mrb[0].mxu0
    %v585 = vpop.f32.mrb[0].mxu0
    %v586 = vadd.f32 0.0, %v585
    %v587 = vpop.f32.mrb[0].mxu0
    %588 = vmatprep.mubr.bf16.mxu0 0
    %589 = vmatmul.mubr.bf16.gmra.mrb[0].mxu0 %v337
    %v590 = vpop.f32.mrb[0].mxu0
    %v591 = vadd.f32 0.0, %v590
    %v592 = vpop.f32.mrb[0].mxu0
    %v593 = vpop.f32.mrb[0].mxu0
    %v594 = vadd.f32 0.0, %v593
    %v595 = vpop.f32.mrb[0].mxu0
    %596 = vmatprep.mubr.bf16.mxu0 0
    %597 = vmatmul.mubr.bf16.gmra.mrb[0].mxu0 %v340
    %v598 = vpop.f32.mrb[0].mxu0
    %v599 = vadd.f32 0.0, %v598
    %v600 = vpop.f32.mrb[0].mxu0
    %v601 = vpop.f32.mrb[0].mxu0
    %v602 = vadd.f32 0.0, %v601
    %v603 = vpop.f32.mrb[0].mxu0
    %604 = vmatprep.mubr.bf16.mxu0 0
    %605 = vmatmul.mubr.bf16.gmra.mrb[0].mxu0 %v343
    %v606 = vpop.f32.mrb[0].mxu0
    %v607 = vadd.f32 0.0, %v606
    %v608 = vpop.f32.mrb[0].mxu0
    %v609 = vpop.f32.mrb[0].mxu0
    %v610 = vadd.f32 0.0, %v609
    %v611 = vpop.f32.mrb[0].mxu0
    %612 = vmatprep.mubr.bf16.mxu0 0
    %613 = vmatmul.mubr.bf16.gmra.mrb[0].mxu0 %v346
    %v614 = vpop.f32.mrb[0].mxu0
    %v615 = vadd.f32 0.0, %v614
    %v616 = vpop.f32.mrb[0].mxu0
    %v617 = vpop.f32.mrb[0].mxu0
    %v618 = vadd.f32 0.0, %v617
    %v619 = vpop.f32.mrb[0].mxu0
    %620 = vmatprep.mubr.bf16.mxu0 0
    %621 = vmatmul.mubr.bf16.gmra.mrb[0].mxu0 %v349
    %v622 = vpop.f32.mrb[0].mxu0
    %v623 = vadd.f32 0.0, %v622
    %v624 = vpop.f32.mrb[0].mxu0
    %v625 = vpop.f32.mrb[0].mxu0
    %v626 = vadd.f32 0.0, %v625
    %v627 = vpop.f32.mrb[0].mxu0
    %628 = vmatprep.mubr.bf16.mxu0 0
    %629 = vmatmul.mubr.bf16.gmra.mrb[0].mxu0 %v352
    %v630 = vpop.f32.mrb[0].mxu0
    %v631 = vadd.f32 0.0, %v630
    %v632 = vpop.f32.mrb[0].mxu0
    %v633 = vpop.f32.mrb[0].mxu0
    %v634 = vadd.f32 0.0, %v633
    %v635 = vpop.f32.mrb[0].mxu0
    %636 = vmatprep.mubr.bf16.mxu0 0
    %637 = vmatmul.mubr.bf16.gmra.mrb[0].mxu0 %v355
    %v638 = vpop.f32.mrb[0].mxu0
    %v639 = vadd.f32 0.0, %v638
    %v640 = vpop.f32.mrb[0].mxu0
    %v641 = vpop.f32.mrb[0].mxu0
    %v642 = vadd.f32 0.0, %v641
    %v643 = vpop.f32.mrb[0].mxu0
    %644 = vmatprep.mubr.bf16.mxu0 0
    %645 = vmatmul.mubr.bf16.gmra.mrb[0].mxu0 %v358
    %v646 = vpop.f32.mrb[0].mxu0
    %v647 = vadd.f32 0.0, %v646
    %v648 = vpop.f32.mrb[0].mxu0
    %v649 = vpop.f32.mrb[0].mxu0
    %v650 = vadd.f32 0.0, %v649
    %v651 = vpop.f32.mrb[0].mxu0
    %652 = vdwg.mxu0
    %v653 = vld [vmem:[%s2] sm:$0x1]
    %v655 = vlaneseq
    %v656 = vshrl.u32 %v655, 7
    %v657 = vsub.s32 0, %v656
    %v658 = vrot.slane %v653, %v657
    %v660 = vmul.f32 %v399, %v658
    %v661 = vmul.f32 %v402, %v658
    %v662 = vmul.f32 %v407, %v658
    %v663 = vmul.f32 %v410, %v658
    %v664 = vmul.f32 %v415, %v658
    %v665 = vmul.f32 %v418, %v658
    %v666 = vmul.f32 %v423, %v658
    %v667 = vmul.f32 %v426, %v658
    %v668 = vmul.f32 %v431, %v658
    %v669 = vmul.f32 %v434, %v658
    %v670 = vmul.f32 %v439, %v658
    %v671 = vmul.f32 %v442, %v658
    %v672 = vmul.f32 %v447, %v658
    %v673 = vmul.f32 %v450, %v658
    %v674 = vmul.f32 %v455, %v658
    %v675 = vmul.f32 %v458, %v658
    %v676 = vmul.f32 %v463, %v658
    %v677 = vmul.f32 %v466, %v658
    %v678 = vmul.f32 %v471, %v658
    %v679 = vmul.f32 %v474, %v658
    %v680 = vmul.f32 %v479, %v658
    %v681 = vmul.f32 %v482, %v658
    %v682 = vmul.f32 %v487, %v658
    %v683 = vmul.f32 %v490, %v658
    %v684 = vmul.f32 %v495, %v658
    %v685 = vmul.f32 %v498, %v658
    %v686 = vmul.f32 %v503, %v658
    %v687 = vmul.f32 %v506, %v658
    %v688 = vmul.f32 %v511, %v658
    %v689 = vmul.f32 %v514, %v658
    %v690 = vmul.f32 %v519, %v658
    %v691 = vmul.f32 %v522, %v658
    %v692 = vmul.f32 %v527, %v658
    %v693 = vmul.f32 %v530, %v658
    %v694 = vmul.f32 %v535, %v658
    %v695 = vmul.f32 %v538, %v658
    %v696 = vmul.f32 %v543, %v658
    %v697 = vmul.f32 %v546, %v658
    %v698 = vmul.f32 %v551, %v658
    %v699 = vmul.f32 %v554, %v658
    %v700 = vmul.f32 %v559, %v658
    %v701 = vmul.f32 %v562, %v658
    %v702 = vmul.f32 %v567, %v658
    %v703 = vmul.f32 %v570, %v658
    %v704 = vmul.f32 %v575, %v658
    %v705 = vmul.f32 %v578, %v658
    %v706 = vmul.f32 %v583, %v658
    %v707 = vmul.f32 %v586, %v658
    %v708 = vmul.f32 %v591, %v658
    %v709 = vmul.f32 %v594, %v658
    %v710 = vmul.f32 %v599, %v658
    %v711 = vmul.f32 %v602, %v658
    %v712 = vmul.f32 %v607, %v658
    %v713 = vmul.f32 %v610, %v658
    %v714 = vmul.f32 %v615, %v658
    %v715 = vmul.f32 %v618, %v658
    %v716 = vmul.f32 %v623, %v658
    %v717 = vmul.f32 %v626, %v658
    %v718 = vmul.f32 %v631, %v658
    %v719 = vmul.f32 %v634, %v658
    %v720 = vmul.f32 %v639, %v658
    %v721 = vmul.f32 %v642, %v658
    %v722 = vmul.f32 %v647, %v658
    %v723 = vmul.f32 %v650, %v658
    %v724 = vld [vmem:[%s3] sm:$0x1]
    %v726 = vlaneseq
    %v727 = vshrl.u32 %v726, 7
    %v728 = vsub.s32 0, %v727
    %v729 = vrot.slane %v724, %v728
    %v731 = vadd.f32 %v660, %v729
    %v732 = vadd.f32 %v661, %v729
    %v733 = vadd.f32 %v662, %v729
    %v734 = vadd.f32 %v663, %v729
    %v735 = vadd.f32 %v664, %v729
    %v736 = vadd.f32 %v665, %v729
    %v737 = vadd.f32 %v666, %v729
    %v738 = vadd.f32 %v667, %v729
    %v739 = vadd.f32 %v668, %v729
    %v740 = vadd.f32 %v669, %v729
    %v741 = vadd.f32 %v670, %v729
    %v742 = vadd.f32 %v671, %v729
    %v743 = vadd.f32 %v672, %v729
    %v744 = vadd.f32 %v673, %v729
    %v745 = vadd.f32 %v674, %v729
    %v746 = vadd.f32 %v675, %v729
    %v747 = vadd.f32 %v676, %v729
    %v748 = vadd.f32 %v677, %v729
    %v749 = vadd.f32 %v678, %v729
    %v750 = vadd.f32 %v679, %v729
    %v751 = vadd.f32 %v680, %v729
    %v752 = vadd.f32 %v681, %v729
    %v753 = vadd.f32 %v682, %v729
    %v754 = vadd.f32 %v683, %v729
    %v755 = vadd.f32 %v684, %v729
    %v756 = vadd.f32 %v685, %v729
    %v757 = vadd.f32 %v686, %v729
    %v758 = vadd.f32 %v687, %v729
    %v759 = vadd.f32 %v688, %v729
    %v760 = vadd.f32 %v689, %v729
    %v761 = vadd.f32 %v690, %v729
    %v762 = vadd.f32 %v691, %v729
    %v763 = vadd.f32 %v692, %v729
    %v764 = vadd.f32 %v693, %v729
    %v765 = vadd.f32 %v694, %v729
    %v766 = vadd.f32 %v695, %v729
    %v767 = vadd.f32 %v696, %v729
    %v768 = vadd.f32 %v697, %v729
    %v769 = vadd.f32 %v698, %v729
    %v770 = vadd.f32 %v699, %v729
    %v771 = vadd.f32 %v700, %v729
    %v772 = vadd.f32 %v701, %v729
    %v773 = vadd.f32 %v702, %v729
    %v774 = vadd.f32 %v703, %v729
    %v775 = vadd.f32 %v704, %v729
    %v776 = vadd.f32 %v705, %v729
    %v777 = vadd.f32 %v706, %v729
    %v778 = vadd.f32 %v707, %v729
    %v779 = vadd.f32 %v708, %v729
    %v780 = vadd.f32 %v709, %v729
    %v781 = vadd.f32 %v710, %v729
    %v782 = vadd.f32 %v711, %v729
    %v783 = vadd.f32 %v712, %v729
    %v784 = vadd.f32 %v713, %v729
    %v785 = vadd.f32 %v714, %v729
    %v786 = vadd.f32 %v715, %v729
    %v787 = vadd.f32 %v716, %v729
    %v788 = vadd.f32 %v717, %v729
    %v789 = vadd.f32 %v718, %v729
    %v790 = vadd.f32 %v719, %v729
    %v791 = vadd.f32 %v720, %v729
    %v792 = vadd.f32 %v721, %v729
    %v793 = vadd.f32 %v722, %v729
    %v794 = vadd.f32 %v723, %v729
    %v795 = vsub.f32 0.0, %v731
    %v796 = vsub.f32 0.0, %v732
    %v797 = vsub.f32 0.0, %v733
    %v798 = vsub.f32 0.0, %v734
    %v799 = vsub.f32 0.0, %v735
    %v800 = vsub.f32 0.0, %v736
    %v801 = vsub.f32 0.0, %v737
    %v802 = vsub.f32 0.0, %v738
    %v803 = vsub.f32 0.0, %v739
    %v804 = vsub.f32 0.0, %v740
    %v805 = vsub.f32 0.0, %v741
    %v806 = vsub.f32 0.0, %v742
    %v807 = vsub.f32 0.0, %v743
    %v808 = vsub.f32 0.0, %v744
    %v809 = vsub.f32 0.0, %v745
    %v810 = vsub.f32 0.0, %v746
    %v811 = vsub.f32 0.0, %v747
    %v812 = vsub.f32 0.0, %v748
    %v813 = vsub.f32 0.0, %v749
    %v814 = vsub.f32 0.0, %v750
    %v815 = vsub.f32 0.0, %v751
    %v816 = vsub.f32 0.0, %v752
    %v817 = vsub.f32 0.0, %v753
    %v818 = vsub.f32 0.0, %v754
    %v819 = vsub.f32 0.0, %v755
    %v820 = vsub.f32 0.0, %v756
    %v821 = vsub.f32 0.0, %v757
    %v822 = vsub.f32 0.0, %v758
    %v823 = vsub.f32 0.0, %v759
    %v824 = vsub.f32 0.0, %v760
    %v825 = vsub.f32 0.0, %v761
    %v826 = vsub.f32 0.0, %v762
    %v827 = vsub.f32 0.0, %v763
    %v828 = vsub.f32 0.0, %v764
    %v829 = vsub.f32 0.0, %v765
    %v830 = vsub.f32 0.0, %v766
    %v831 = vsub.f32 0.0, %v767
    %v832 = vsub.f32 0.0, %v768
    %v833 = vsub.f32 0.0, %v769
    %v834 = vsub.f32 0.0, %v770
    %v835 = vsub.f32 0.0, %v771
    %v836 = vsub.f32 0.0, %v772
    %v837 = vsub.f32 0.0, %v773
    %v838 = vsub.f32 0.0, %v774
    %v839 = vsub.f32 0.0, %v775
    %v840 = vsub.f32 0.0, %v776
    %v841 = vsub.f32 0.0, %v777
    %v842 = vsub.f32 0.0, %v778
    %v843 = vsub.f32 0.0, %v779
    %v844 = vsub.f32 0.0, %v780
    %v845 = vsub.f32 0.0, %v781
    %v846 = vsub.f32 0.0, %v782
    %v847 = vsub.f32 0.0, %v783
    %v848 = vsub.f32 0.0, %v784
    %v849 = vsub.f32 0.0, %v785
    %v850 = vsub.f32 0.0, %v786
    %v851 = vsub.f32 0.0, %v787
    %v852 = vsub.f32 0.0, %v788
    %v853 = vsub.f32 0.0, %v789
    %v854 = vsub.f32 0.0, %v790
    %v855 = vsub.f32 0.0, %v791
    %v856 = vsub.f32 0.0, %v792
    %v857 = vsub.f32 0.0, %v793
    %v858 = vsub.f32 0.0, %v794
    %v859 = vmul.f32 %v795, 1.442695
    %v860 = vpow.pop %v859
    %v861 = vmul.f32 %v796, 1.442695
    %v862 = vpow.pop %v861
    %v863 = vmul.f32 %v797, 1.442695
    %v864 = vpow.pop %v863
    %v865 = vmul.f32 %v798, 1.442695
    %v866 = vpow.pop %v865
    %v867 = vmul.f32 %v799, 1.442695
    %v868 = vpow.pop %v867
    %v869 = vmul.f32 %v800, 1.442695
    %v870 = vpow.pop %v869
    %v871 = vmul.f32 %v801, 1.442695
    %v872 = vpow.pop %v871
    %v873 = vmul.f32 %v802, 1.442695
    %v874 = vpow.pop %v873
    %v875 = vmul.f32 %v803, 1.442695
    %v876 = vpow.pop %v875
    %v877 = vmul.f32 %v804, 1.442695
    %v878 = vpow.pop %v877
    %v879 = vmul.f32 %v805, 1.442695
    %v880 = vpow.pop %v879
    %v881 = vmul.f32 %v806, 1.442695
    %v882 = vpow.pop %v881
    %v883 = vmul.f32 %v807, 1.442695
    %v884 = vpow.pop %v883
    %v885 = vmul.f32 %v808, 1.442695
    %v886 = vpow.pop %v885
    %v887 = vmul.f32 %v809, 1.442695
    %v888 = vpow.pop %v887
    %v889 = vmul.f32 %v810, 1.442695
    %v890 = vpow.pop %v889
    %v891 = vmul.f32 %v811, 1.442695
    %v892 = vpow.pop %v891
    %v893 = vmul.f32 %v812, 1.442695
    %v894 = vpow.pop %v893
    %v895 = vmul.f32 %v813, 1.442695
    %v896 = vpow.pop %v895
    %v897 = vmul.f32 %v814, 1.442695
    %v898 = vpow.pop %v897
    %v899 = vmul.f32 %v815, 1.442695
    %v900 = vpow.pop %v899
    %v901 = vmul.f32 %v816, 1.442695
    %v902 = vpow.pop %v901
    %v903 = vmul.f32 %v817, 1.442695
    %v904 = vpow.pop %v903
    %v905 = vmul.f32 %v818, 1.442695
    %v906 = vpow.pop %v905
    %v907 = vmul.f32 %v819, 1.442695
    %v908 = vpow.pop %v907
    %v909 = vmul.f32 %v820, 1.442695
    %v910 = vpow.pop %v909
    %v911 = vmul.f32 %v821, 1.442695
    %v912 = vpow.pop %v911
    %v913 = vmul.f32 %v822, 1.442695
    %v914 = vpow.pop %v913
    %v915 = vmul.f32 %v823, 1.442695
    %v916 = vpow.pop %v915
    %v917 = vmul.f32 %v824, 1.442695
    %v918 = vpow.pop %v917
    %v919 = vmul.f32 %v825, 1.442695
    %v920 = vpow.pop %v919
    %v921 = vmul.f32 %v826, 1.442695
    %v922 = vpow.pop %v921
    %v923 = vmul.f32 %v827, 1.442695
    %v924 = vpow.pop %v923
    %v925 = vmul.f32 %v828, 1.442695
    %v926 = vpow.pop %v925
    %v927 = vmul.f32 %v829, 1.442695
    %v928 = vpow.pop %v927
    %v929 = vmul.f32 %v830, 1.442695
    %v930 = vpow.pop %v929
    %v931 = vmul.f32 %v831, 1.442695
    %v932 = vpow.pop %v931
    %v933 = vmul.f32 %v832, 1.442695
    %v934 = vpow.pop %v933
    %v935 = vmul.f32 %v833, 1.442695
    %v936 = vpow.pop %v935
    %v937 = vmul.f32 %v834, 1.442695
    %v938 = vpow.pop %v937
    %v939 = vmul.f32 %v835, 1.442695
    %v940 = vpow.pop %v939
    %v941 = vmul.f32 %v836, 1.442695
    %v942 = vpow.pop %v941
    %v943 = vmul.f32 %v837, 1.442695
    %v944 = vpow.pop %v943
    %v945 = vmul.f32 %v838, 1.442695
    %v946 = vpow.pop %v945
    %v947 = vmul.f32 %v839, 1.442695
    %v948 = vpow.pop %v947
    %v949 = vmul.f32 %v840, 1.442695
    %v950 = vpow.pop %v949
    %v951 = vmul.f32 %v841, 1.442695
    %v952 = vpow.pop %v951
    %v953 = vmul.f32 %v842, 1.442695
    %v954 = vpow.pop %v953
    %v955 = vmul.f32 %v843, 1.442695
    %v956 = vpow.pop %v955
    %v957 = vmul.f32 %v844, 1.442695
    %v958 = vpow.pop %v957
    %v959 = vmul.f32 %v845, 1.442695
    %v960 = vpow.pop %v959
    %v961 = vmul.f32 %v846, 1.442695
    %v962 = vpow.pop %v961
    %v963 = vmul.f32 %v847, 1.442695
    %v964 = vpow.pop %v963
    %v965 = vmul.f32 %v848, 1.442695
    %v966 = vpow.pop %v965
    %v967 = vmul.f32 %v849, 1.442695
    %v968 = vpow.pop %v967
    %v969 = vmul.f32 %v850, 1.442695
    %v970 = vpow.pop %v969
    %v971 = vmul.f32 %v851, 1.442695
    %v972 = vpow.pop %v971
    %v973 = vmul.f32 %v852, 1.442695
    %v974 = vpow.pop %v973
    %v975 = vmul.f32 %v853, 1.442695
    %v976 = vpow.pop %v975
    %v977 = vmul.f32 %v854, 1.442695
    %v978 = vpow.pop %v977
    %v979 = vmul.f32 %v855, 1.442695
    %v980 = vpow.pop %v979
    %v981 = vmul.f32 %v856, 1.442695
    %v982 = vpow.pop %v981
    %v983 = vmul.f32 %v857, 1.442695
    %v984 = vpow.pop %v983
    %v985 = vmul.f32 %v858, 1.442695
    %v986 = vpow.pop %v985
    %v987 = vadd.f32 %v860, 1.0
    %v988 = vadd.f32 %v862, 1.0
    %v989 = vadd.f32 %v864, 1.0
    %v990 = vadd.f32 %v866, 1.0
    %v991 = vadd.f32 %v868, 1.0
    %v992 = vadd.f32 %v870, 1.0
    %v993 = vadd.f32 %v872, 1.0
    %v994 = vadd.f32 %v874, 1.0
    %v995 = vadd.f32 %v876, 1.0
    %v996 = vadd.f32 %v878, 1.0
    %v997 = vadd.f32 %v880, 1.0
    %v998 = vadd.f32 %v882, 1.0
    %v999 = vadd.f32 %v884, 1.0
    %v1000 = vadd.f32 %v886, 1.0
    %v1001 = vadd.f32 %v888, 1.0
    %v1002 = vadd.f32 %v890, 1.0
    %v1003 = vadd.f32 %v892, 1.0
    %v1004 = vadd.f32 %v894, 1.0
    %v1005 = vadd.f32 %v896, 1.0
    %v1006 = vadd.f32 %v898, 1.0
    %v1007 = vadd.f32 %v900, 1.0
    %v1008 = vadd.f32 %v902, 1.0
    %v1009 = vadd.f32 %v904, 1.0
    %v1010 = vadd.f32 %v906, 1.0
    %v1011 = vadd.f32 %v908, 1.0
    %v1012 = vadd.f32 %v910, 1.0
    %v1013 = vadd.f32 %v912, 1.0
    %v1014 = vadd.f32 %v914, 1.0
    %v1015 = vadd.f32 %v916, 1.0
    %v1016 = vadd.f32 %v918, 1.0
    %v1017 = vadd.f32 %v920, 1.0
    %v1018 = vadd.f32 %v922, 1.0
    %v1019 = vadd.f32 %v924, 1.0
    %v1020 = vadd.f32 %v926, 1.0
    %v1021 = vadd.f32 %v928, 1.0
    %v1022 = vadd.f32 %v930, 1.0
    %v1023 = vadd.f32 %v932, 1.0
    %v1024 = vadd.f32 %v934, 1.0
    %v1025 = vadd.f32 %v936, 1.0
    %v1026 = vadd.f32 %v938, 1.0
    %v1027 = vadd.f32 %v940, 1.0
    %v1028 = vadd.f32 %v942, 1.0
    %v1029 = vadd.f32 %v944, 1.0
    %v1030 = vadd.f32 %v946, 1.0
    %v1031 = vadd.f32 %v948, 1.0
    %v1032 = vadd.f32 %v950, 1.0
    %v1033 = vadd.f32 %v952, 1.0
    %v1034 = vadd.f32 %v954, 1.0
    %v1035 = vadd.f32 %v956, 1.0
    %v1036 = vadd.f32 %v958, 1.0
    %v1037 = vadd.f32 %v960, 1.0
    %v1038 = vadd.f32 %v962, 1.0
    %v1039 = vadd.f32 %v964, 1.0
    %v1040 = vadd.f32 %v966, 1.0
    %v1041 = vadd.f32 %v968, 1.0
    %v1042 = vadd.f32 %v970, 1.0
    %v1043 = vadd.f32 %v972, 1.0
    %v1044 = vadd.f32 %v974, 1.0
    %v1045 = vadd.f32 %v976, 1.0
    %v1046 = vadd.f32 %v978, 1.0
    %v1047 = vadd.f32 %v980, 1.0
    %v1048 = vadd.f32 %v982, 1.0
    %v1049 = vadd.f32 %v984, 1.0
    %v1050 = vadd.f32 %v986, 1.0
    %v1051 = vrcp.pop %v987
    %v1052 = vrcp.pop %v988
    %v1053 = vrcp.pop %v989
    %v1054 = vrcp.pop %v990
    %v1055 = vrcp.pop %v991
    %v1056 = vrcp.pop %v992
    %v1057 = vrcp.pop %v993
    %v1058 = vrcp.pop %v994
    %v1059 = vrcp.pop %v995
    %v1060 = vrcp.pop %v996
    %v1061 = vrcp.pop %v997
    %v1062 = vrcp.pop %v998
    %v1063 = vrcp.pop %v999
    %v1064 = vrcp.pop %v1000
    %v1065 = vrcp.pop %v1001
    %v1066 = vrcp.pop %v1002
    %v1067 = vrcp.pop %v1003
    %v1068 = vrcp.pop %v1004
    %v1069 = vrcp.pop %v1005
    %v1070 = vrcp.pop %v1006
    %v1071 = vrcp.pop %v1007
    %v1072 = vrcp.pop %v1008
    %v1073 = vrcp.pop %v1009
    %v1074 = vrcp.pop %v1010
    %v1075 = vrcp.pop %v1011
    %v1076 = vrcp.pop %v1012
    %v1077 = vrcp.pop %v1013
    %v1078 = vrcp.pop %v1014
    %v1079 = vrcp.pop %v1015
    %v1080 = vrcp.pop %v1016
    %v1081 = vrcp.pop %v1017
    %v1082 = vrcp.pop %v1018
    %v1083 = vrcp.pop %v1019
    %v1084 = vrcp.pop %v1020
    %v1085 = vrcp.pop %v1021
    %v1086 = vrcp.pop %v1022
    %v1087 = vrcp.pop %v1023
    %v1088 = vrcp.pop %v1024
    %v1089 = vrcp.pop %v1025
    %v1090 = vrcp.pop %v1026
    %v1091 = vrcp.pop %v1027
    %v1092 = vrcp.pop %v1028
    %v1093 = vrcp.pop %v1029
    %v1094 = vrcp.pop %v1030
    %v1095 = vrcp.pop %v1031
    %v1096 = vrcp.pop %v1032
    %v1097 = vrcp.pop %v1033
    %v1098 = vrcp.pop %v1034
    %v1099 = vrcp.pop %v1035
    %v1100 = vrcp.pop %v1036
    %v1101 = vrcp.pop %v1037
    %v1102 = vrcp.pop %v1038
    %v1103 = vrcp.pop %v1039
    %v1104 = vrcp.pop %v1040
    %v1105 = vrcp.pop %v1041
    %v1106 = vrcp.pop %v1042
    %v1107 = vrcp.pop %v1043
    %v1108 = vrcp.pop %v1044
    %v1109 = vrcp.pop %v1045
    %v1110 = vrcp.pop %v1046
    %v1111 = vrcp.pop %v1047
    %v1112 = vrcp.pop %v1048
    %v1113 = vrcp.pop %v1049
    %v1114 = vrcp.pop %v1050
    %v1115 = vmul.f32 %v731, %v1051
    %v1116 = vmul.f32 %v732, %v1052
    %v1117 = vmul.f32 %v733, %v1053
    %v1118 = vmul.f32 %v734, %v1054
    %v1119 = vmul.f32 %v735, %v1055
    %v1120 = vmul.f32 %v736, %v1056
    %v1121 = vmul.f32 %v737, %v1057
    %v1122 = vmul.f32 %v738, %v1058
    %v1123 = vmul.f32 %v739, %v1059
    %v1124 = vmul.f32 %v740, %v1060
    %v1125 = vmul.f32 %v741, %v1061
    %v1126 = vmul.f32 %v742, %v1062
    %v1127 = vmul.f32 %v743, %v1063
    %v1128 = vmul.f32 %v744, %v1064
    %v1129 = vmul.f32 %v745, %v1065
    %v1130 = vmul.f32 %v746, %v1066
    %v1131 = vmul.f32 %v747, %v1067
    %v1132 = vmul.f32 %v748, %v1068
    %v1133 = vmul.f32 %v749, %v1069
    %v1134 = vmul.f32 %v750, %v1070
    %v1135 = vmul.f32 %v751, %v1071
    %v1136 = vmul.f32 %v752, %v1072
    %v1137 = vmul.f32 %v753, %v1073
    %v1138 = vmul.f32 %v754, %v1074
    %v1139 = vmul.f32 %v755, %v1075
    %v1140 = vmul.f32 %v756, %v1076
    %v1141 = vmul.f32 %v757, %v1077
    %v1142 = vmul.f32 %v758, %v1078
    %v1143 = vmul.f32 %v759, %v1079
    %v1144 = vmul.f32 %v760, %v1080
    %v1145 = vmul.f32 %v761, %v1081
    %v1146 = vmul.f32 %v762, %v1082
    %v1147 = vmul.f32 %v763, %v1083
    %v1148 = vmul.f32 %v764, %v1084
    %v1149 = vmul.f32 %v765, %v1085
    %v1150 = vmul.f32 %v766, %v1086
    %v1151 = vmul.f32 %v767, %v1087
    %v1152 = vmul.f32 %v768, %v1088
    %v1153 = vmul.f32 %v769, %v1089
    %v1154 = vmul.f32 %v770, %v1090
    %v1155 = vmul.f32 %v771, %v1091
    %v1156 = vmul.f32 %v772, %v1092
    %v1157 = vmul.f32 %v773, %v1093
    %v1158 = vmul.f32 %v774, %v1094
    %v1159 = vmul.f32 %v775, %v1095
    %v1160 = vmul.f32 %v776, %v1096
    %v1161 = vmul.f32 %v777, %v1097
    %v1162 = vmul.f32 %v778, %v1098
    %v1163 = vmul.f32 %v779, %v1099
    %v1164 = vmul.f32 %v780, %v1100
    %v1165 = vmul.f32 %v781, %v1101
    %v1166 = vmul.f32 %v782, %v1102
    %v1167 = vmul.f32 %v783, %v1103
    %v1168 = vmul.f32 %v784, %v1104
    %v1169 = vmul.f32 %v785, %v1105
    %v1170 = vmul.f32 %v786, %v1106
    %v1171 = vmul.f32 %v787, %v1107
    %v1172 = vmul.f32 %v788, %v1108
    %v1173 = vmul.f32 %v789, %v1109
    %v1174 = vmul.f32 %v790, %v1110
    %v1175 = vmul.f32 %v791, %v1111
    %v1176 = vmul.f32 %v792, %v1112
    %v1177 = vmul.f32 %v793, %v1113
    %v1178 = vmul.f32 %v794, %v1114
    %1179 = vst [vmem:[#allocation2] sm:$0xff] %v1115
    %1180 = vst [vmem:[#allocation2 + $0x8] sm:$0xff] %v1116
    %1181 = vst [vmem:[#allocation2 + $0x10] sm:$0xff] %v1117
    %1182 = vst [vmem:[#allocation2 + $0x18] sm:$0xff] %v1118
    %1183 = vst [vmem:[#allocation2 + $0x20] sm:$0xff] %v1119
    %1184 = vst [vmem:[#allocation2 + $0x28] sm:$0xff] %v1120
    %1185 = vst [vmem:[#allocation2 + $0x30] sm:$0xff] %v1121
    %1186 = vst [vmem:[#allocation2 + $0x38] sm:$0xff] %v1122
    %1187 = vst [vmem:[#allocation2 + $0x40] sm:$0xff] %v1123
    %1188 = vst [vmem:[#allocation2 + $0x48] sm:$0xff] %v1124
    %1189 = vst [vmem:[#allocation2 + $0x50] sm:$0xff] %v1125
    %1190 = vst [vmem:[#allocation2 + $0x58] sm:$0xff] %v1126
    %1191 = vst [vmem:[#allocation2 + $0x60] sm:$0xff] %v1127
    %1192 = vst [vmem:[#allocation2 + $0x68] sm:$0xff] %v1128
    %1193 = vst [vmem:[#allocation2 + $0x70] sm:$0xff] %v1129
    %1194 = vst [vmem:[#allocation2 + $0x78] sm:$0xff] %v1130
    %1195 = vst [vmem:[#allocation2 + $0x80] sm:$0xff] %v1131
    %1196 = vst [vmem:[#allocation2 + $0x88] sm:$0xff] %v1132
    %1197 = vst [vmem:[#allocation2 + $0x90] sm:$0xff] %v1133
    %1198 = vst [vmem:[#allocation2 + $0x98] sm:$0xff] %v1134
    %1199 = vst [vmem:[#allocation2 + $0xa0] sm:$0xff] %v1135
    %1200 = vst [vmem:[#allocation2 + $0xa8] sm:$0xff] %v1136
    %1201 = vst [vmem:[#allocation2 + $0xb0] sm:$0xff] %v1137
    %1202 = vst [vmem:[#allocation2 + $0xb8] sm:$0xff] %v1138
    %1203 = vst [vmem:[#allocation2 + $0xc0] sm:$0xff] %v1139
    %1204 = vst [vmem:[#allocation2 + $0xc8] sm:$0xff] %v1140
    %1205 = vst [vmem:[#allocation2 + $0xd0] sm:$0xff] %v1141
    %1206 = vst [vmem:[#allocation2 + $0xd8] sm:$0xff] %v1142
    %1207 = vst [vmem:[#allocation2 + $0xe0] sm:$0xff] %v1143
    %1208 = vst [vmem:[#allocation2 + $0xe8] sm:$0xff] %v1144
    %1209 = vst [vmem:[#allocation2 + $0xf0] sm:$0xff] %v1145
    %1210 = vst [vmem:[#allocation2 + $0xf8] sm:$0xff] %v1146
    %1211 = vst [vmem:[#allocation2 + $0x100] sm:$0xff] %v1147
    %1212 = vst [vmem:[#allocation2 + $0x108] sm:$0xff] %v1148
    %1213 = vst [vmem:[#allocation2 + $0x110] sm:$0xff] %v1149
    %1214 = vst [vmem:[#allocation2 + $0x118] sm:$0xff] %v1150
    %1215 = vst [vmem:[#allocation2 + $0x120] sm:$0xff] %v1151
    %1216 = vst [vmem:[#allocation2 + $0x128] sm:$0xff] %v1152
    %1217 = vst [vmem:[#allocation2 + $0x130] sm:$0xff] %v1153
    %1218 = vst [vmem:[#allocation2 + $0x138] sm:$0xff] %v1154
    %1219 = vst [vmem:[#allocation2 + $0x140] sm:$0xff] %v1155
    %1220 = vst [vmem:[#allocation2 + $0x148] sm:$0xff] %v1156
    %1221 = vst [vmem:[#allocation2 + $0x150] sm:$0xff] %v1157
    %1222 = vst [vmem:[#allocation2 + $0x158] sm:$0xff] %v1158
    %1223 = vst [vmem:[#allocation2 + $0x160] sm:$0xff] %v1159
    %1224 = vst [vmem:[#allocation2 + $0x168] sm:$0xff] %v1160
    %1225 = vst [vmem:[#allocation2 + $0x170] sm:$0xff] %v1161
    %1226 = vst [vmem:[#allocation2 + $0x178] sm:$0xff] %v1162
    %1227 = vst [vmem:[#allocation2 + $0x180] sm:$0xff] %v1163
    %1228 = vst [vmem:[#allocation2 + $0x188] sm:$0xff] %v1164
    %1229 = vst [vmem:[#allocation2 + $0x190] sm:$0xff] %v1165
    %1230 = vst [vmem:[#allocation2 + $0x198] sm:$0xff] %v1166
    %1231 = vst [vmem:[#allocation2 + $0x1a0] sm:$0xff] %v1167
    %1232 = vst [vmem:[#allocation2 + $0x1a8] sm:$0xff] %v1168
    %1233 = vst [vmem:[#allocation2 + $0x1b0] sm:$0xff] %v1169
    %1234 = vst [vmem:[#allocation2 + $0x1b8] sm:$0xff] %v1170
    %1235 = vst [vmem:[#allocation2 + $0x1c0] sm:$0xff] %v1171
    %1236 = vst [vmem:[#allocation2 + $0x1c8] sm:$0xff] %v1172
    %1237 = vst [vmem:[#allocation2 + $0x1d0] sm:$0xff] %v1173
    %1238 = vst [vmem:[#allocation2 + $0x1d8] sm:$0xff] %v1174
    %1239 = vst [vmem:[#allocation2 + $0x1e0] sm:$0xff] %v1175
    %1240 = vst [vmem:[#allocation2 + $0x1e8] sm:$0xff] %v1176
    %1241 = vst [vmem:[#allocation2 + $0x1f0] sm:$0xff] %v1177
    %1242 = vst [vmem:[#allocation2 + $0x1f8] sm:$0xff] %v1178
    // Predicated region
    $region18: #{tpu_custom_call.1} parent=1 // pred_check
      _
    $region19: #{tpu_custom_call.1} parent=1 // pred_check_branch
      %1244 = sbr.rel (0) target = $region21
    $region20: #{tpu_custom_call.1} parent=1 // pred_region
      %s1246 = ssub.s32 8192, 8192
      %1247 = vsyncadd [#allocation3], %s1246
      %s1248 = sshll.u32 [#allocation2], 4
      %s1249 = int_to_ptr.vmem [resolvable:$true] %s1248
      %1254 = dma.vmem_to_hbm [thread:$0]  %s1249, 8192, %s4, [#allocation3], 128, 128, 8
    $region21: #{tpu_custom_call.1} parent=1 // pred_fallthru
      _
    // Predicated region
    $region22: #{tpu_custom_call.1} parent=1 // pred_check
      _
    $region23: #{tpu_custom_call.1} parent=1 // pred_check_branch
      %1256 = sbr.rel (0) target = $region25
    $region24: #{tpu_custom_call.1} parent=1 // pred_region
      %1257 = dma.done [#allocation3], 8192
    $region25: #{tpu_custom_call.1} parent=1 // pred_fallthru
      _
    %1258 = vsyncpa [#allocation3], 1

</llo_original>
